<compile_context>
chip_gen: v7x
topology: tpu7x:2x2x1
jax: 0.10.0
libtpu: 0.0.40
codegen_flags: <defaults>
</compile_context>

<pallas_src>
import math

import jax
import jax.numpy as jnp
from jax.experimental import pallas as pl
from jax.experimental.pallas import tpu as pltpu

_LANE = 128  # TPU lane width


def _relu_plus_one_kernel(x_ref, o_ref):
    x = x_ref[...]
    # Build constants in the input dtype: weak-typed float literals would
    # silently promote integer inputs to f32 while out_shape keeps the int
    # dtype. For the module's float inputs this is identical to relu(x)+1.0.
    zero = jnp.asarray(0, dtype=x.dtype)
    one = jnp.asarray(1, dtype=x.dtype)
    o_ref[...] = jnp.maximum(x, zero) + one


def _device_kind() -> str:
    try:
        return jax.devices()[0].device_kind.lower()
    except Exception:
        return ""


def relu_plus_one(x: jax.Array) -> jax.Array:
    """Computes relu(x) + 1.0 with a Pallas TPU kernel. Works for any shape."""
    orig_shape = x.shape
    dtype = x.dtype
    n = int(math.prod(orig_shape)) if orig_shape else 1
    if n == 0:
        return x

    itemsize = jnp.dtype(dtype).itemsize
    # dtype-aware packing quantum: f32 packs 8 rows / vreg, bf16 16, int8/fp8 32.
    sub = max(8, 32 // itemsize)

    kind = _device_kind()
    is_v7 = ("v7" in kind) or ("tpu7" in kind)
    target_block_bytes = (8 << 20) if is_v7 else (4 << 20)

    flat = x.reshape(-1)

    if n % _LANE == 0:
        # ---- lane-dense 2-D slab path (no padding ever needed) ----
        # Widest lane width dividing n, preferring one that keeps rows a
        # multiple of the packing quantum so vregs are fully packed.
        lane = None
        for prefer_packed in (True, False):
            for cand in (4096, 2048, 1024, 512, 256, 128):
                if n % cand == 0 and (not prefer_packed or (n // cand) % sub == 0):
                    lane = cand
                    break
            if lane is not None:
                break
        rows = n // lane

        # Tile rows: target the generation-specific block size, multiple of sub.
        tile_rows = max(sub, (target_block_bytes // (lane * itemsize)) // sub * sub)
        if rows <= tile_rows:
            # Single full-extent block: no (8,128) divisibility requirement.
            tile_rows = rows
        grid = (pl.cdiv(rows, tile_rows),)

        x2d = flat.reshape(rows, lane)
        block_shape = (tile_rows, lane)
        out_shape = jax.ShapeDtypeStruct((rows, lane), dtype)
        index_map = lambda i: (i, 0)
        block_vmem = (-(-tile_rows // sub) * sub) * lane * itemsize
    else:
        # ---- ragged path: unpadded (1, n) slab, tile along lanes ----
        # Pallas masks OOB reads/writes of the partial trailing block, so no
        # wrapper-side pad + slice HBM round-trips. A (1, L) tile occupies 8
        # sublanes in VMEM, so size the lane tile with that 8x in mind.
        x2d = flat.reshape(1, n)
        tile_lane = max(_LANE, (target_block_bytes // (8 * itemsize)) // _LANE * _LANE)
        if n <= tile_lane:
            tile_lane = n  # full-extent block: no 128-divisibility requirement
        grid = (pl.cdiv(n, tile_lane),)

        block_shape = (1, tile_lane)
        out_shape = jax.ShapeDtypeStruct((1, n), dtype)
        index_map = lambda i: (0, i)
        block_vmem = 8 * (-(-tile_lane // _LANE) * _LANE) * itemsize

    # VMEM budget: 2 pipeline buffers x (in + out) x block, plus headroom,
    # clamped to the generation's physical VMEM.
    vmem_cap = (64 << 20) if is_v7 else (128 << 20)
    vmem_limit = int(min(vmem_cap, max(32 << 20, 4 * block_vmem + (16 << 20))))

    def run(semantics):
        return pl.pallas_call(
            _relu_plus_one_kernel,
            out_shape=out_shape,
            grid_spec=pltpu.PrefetchScalarGridSpec(
                num_scalar_prefetch=0,
                grid=grid,
                in_specs=[pl.BlockSpec(block_shape, index_map)],
                out_specs=pl.BlockSpec(block_shape, index_map),
            ),
            compiler_params=pltpu.CompilerParams(
                dimension_semantics=(semantics,),
                vmem_limit_bytes=vmem_limit,
            ),
        )(x2d)

    if is_v7 and grid[0] >= 2:
        # Only CORE_PARALLEL actually shards a grid axis across the two v7x
        # TensorCores; fall back gracefully if unsupported.
        core_parallel = getattr(pltpu, "CORE_PARALLEL", "parallel")
        try:
            out2d = run(core_parallel)
        except Exception:
            out2d = run("parallel")
    else:
        out2d = run("parallel")

    return out2d.reshape(orig_shape)


if __name__ == "__main__":
    key = jax.random.PRNGKey(0)
    # Small NCHW-shaped input consistent with the module's elementwise forward.
    x = jax.random.normal(key, (2, 4, 16, 16), dtype=jnp.float32)

    y = relu_plus_one(x)
    y = jax.block_until_ready(y)

    # Reference check in plain JAX.
    y_ref = jnp.maximum(x, 0.0) + 1.0
    assert y.shape == x.shape and y.dtype == x.dtype
    assert jnp.allclose(y, y_ref, atol=1e-6), "mismatch vs reference"

    print("KERNEL_OK")
</pallas_src>

<mosaic_0001>
module attributes {stable_mosaic.version = 11 : i64} {
  func.func @_relu_plus_one_kernel(%arg0: i32, %arg1: memref<8x256xf32, #tpu.memory_space<vmem>>, %arg2: memref<8x256xf32, #tpu.memory_space<vmem>>) attributes {dimension_semantics = [#tpu.dimension_semantics<parallel>], iteration_bounds = array<i64: 1>, scalar_prefetch = 0 : i64, scratch_operands = 0 : i64, tpu.core_type = #tpu.core_type<tc>, window_params = [{transform_indices = @transform_0, window_bounds = array<i64: 8, 256>}, {transform_indices = @transform_1, window_bounds = array<i64: 8, 256>}]} {
    %c0 = arith.constant 0 : index
    %c0_0 = arith.constant 0 : index
    %0 = vector.load %arg1[%c0, %c0_0] : memref<8x256xf32, #tpu.memory_space<vmem>>, vector<8x256xf32>
    %cst = arith.constant 0.000000e+00 : f32
    %1 = vector.broadcast %cst : f32 to vector<8x256xf32>
    %2 = arith.maximumf %0, %1 : vector<8x256xf32>
    %cst_1 = arith.constant 1.000000e+00 : f32
    %3 = vector.broadcast %cst_1 : f32 to vector<8x256xf32>
    %4 = arith.addf %2, %3 : vector<8x256xf32>
    %c0_2 = arith.constant 0 : index
    %c0_3 = arith.constant 0 : index
    %5 = vector.load %arg2[%c0_2, %c0_3] : memref<8x256xf32, #tpu.memory_space<vmem>>, vector<8x256xf32>
    tpu.vector_store %arg2[%c0_2, %c0_3], %4 {strides = array<i32>} : memref<8x256xf32, #tpu.memory_space<vmem>>, vector<8x256xf32>,
    return
  }
  func.func @transform_0(%arg0: i32) -> (i32, i32) {
    %c0_i32 = arith.constant 0 : i32
    %c0_i32_0 = arith.constant 0 : i32
    return %arg0, %c0_i32 : i32, i32
  }
  func.func @transform_1(%arg0: i32) -> (i32, i32) {
    %c0_i32 = arith.constant 0 : i32
    %c0_i32_0 = arith.constant 0 : i32
    return %arg0, %c0_i32 : i32, i32
  }
}

</mosaic_0001>

<llo_original>
// kernel: tpu_custom_call.1
$region0: #{tpu_custom_call.1}
  #allocation0 [shape = 'u32[]', space=smem, size = 0x4, offset = 0x4, fixed_abs, tag = 'smem constant byte address 0x4 - core index']
  #allocation1 [shape = 'u32[144,128]{1,0:T(1,128)}', space=vmem, size = 0x12000, scoped, tag = 'internal scratch']
  %s0 = inlined_call_operand.hbm [shape: f32[8,256], index: 0, kind: input, shape index: {}]
  %s1 = inlined_call_operand.hbm [shape: f32[8,256], index: 1, kind: output, shape index: {}]
  %s2 = sld [smem:[#allocation0]]
  $region18: #{tpu_custom_call.1} parent=0
    _
  %s4 = ssub.s32 1, %s2
  %s5 = scalar_select 0, %s4, %s2
  $region1: #{tpu_custom_call.1} parent=0
    #allocation2 [shape = 'u8[8192]{0}', space=vmem, size = 0x2000, scoped, tag = 'input window, operand 0, single buffered']
    #allocation3 [shape = 's32[1]{0}', space=sflag, size = 0x4, scoped, tag = 'scoped memory for tpu_custom_call.1']
    #allocation4 [shape = 's32[1]{0}', space=sflag, size = 0x4, scoped, tag = 'scoped memory for tpu_custom_call.1']
    #allocation5 [shape = 'u8[8192]{0}', space=vmem, size = 0x2000, scoped, tag = 'output window, operand 0, single buffered']
    %6 = vsyncpa [#allocation3], 0
    %7 = vsyncpa [#allocation4], 0
    // Predicated region
    $region2: #{tpu_custom_call.1} parent=1 // pred_check
      _
    $region3: #{tpu_custom_call.1} parent=1 // pred_check_branch
      %9 = sbr.rel (0) target = $region5
    $region4: #{tpu_custom_call.1} parent=1 // pred_region
      %s11 = ssub.s32 256, 256
      %12 = vsyncadd [#allocation3], %s11
      %s14 = sshll.u32 [#allocation2], 4
      %s15 = int_to_ptr.vmem [resolvable:$true] %s14
      %17 = dma.hbm_to_vmem [thread:$0]  %s0, 256, %s15, [#allocation3]
    $region5: #{tpu_custom_call.1} parent=1 // pred_fallthru
      _
    // Predicated region
    $region6: #{tpu_custom_call.1} parent=1 // pred_check
      _
    $region7: #{tpu_custom_call.1} parent=1 // pred_check_branch
      %19 = sbr.rel (0) target = $region9
    $region8: #{tpu_custom_call.1} parent=1 // pred_region
      %20 = dma.done [#allocation3], 256
    $region9: #{tpu_custom_call.1} parent=1 // pred_fallthru
      _
    %v21 = vld [vmem:[#allocation2] sm:$0xff]
    %v22 = vld [vmem:[#allocation2 + $0x8] sm:$0xff]
    %v23 = vmax.f32 %v21, 0.0
    %v24 = vmax.f32 %v22, 0.0
    %v25 = vadd.f32 %v23, 1.0
    %v26 = vadd.f32 %v24, 1.0
    %27 = vst [vmem:[#allocation5] sm:$0xff] %v25
    %28 = vst [vmem:[#allocation5 + $0x8] sm:$0xff] %v26
    // Predicated region
    $region10: #{tpu_custom_call.1} parent=1 // pred_check
      _
    $region11: #{tpu_custom_call.1} parent=1 // pred_check_branch
      %30 = sbr.rel (0) target = $region13
    $region12: #{tpu_custom_call.1} parent=1 // pred_region
      %s32 = ssub.s32 256, 256
      %33 = vsyncadd [#allocation4], %s32
      %s35 = sshll.u32 [#allocation5], 4
      %s36 = int_to_ptr.vmem [resolvable:$true] %s35
      %38 = dma.vmem_to_hbm [thread:$0]  %s36, 256, %s1, [#allocation4]
    $region13: #{tpu_custom_call.1} parent=1 // pred_fallthru
      _
    // Predicated region
    $region14: #{tpu_custom_call.1} parent=1 // pred_check
      _
    $region15: #{tpu_custom_call.1} parent=1 // pred_check_branch
      %40 = sbr.rel (0) target = $region17
    $region16: #{tpu_custom_call.1} parent=1 // pred_region
      %41 = dma.done [#allocation4], 256
    $region17: #{tpu_custom_call.1} parent=1 // pred_fallthru
      _
    %42 = vsyncpa [#allocation3], 1
    %43 = vsyncpa [#allocation4], 1

</llo_original>
